<compile_context>
chip_gen: v5e
topology: v5e:2x2
jax: 0.10.0
libtpu: 0.0.40
codegen_flags: <defaults>
</compile_context>

<pallas_src>
import jax
import jax.numpy as jnp
from jax.experimental import pallas as pl
from jax.experimental.pallas import tpu as pltpu


# ------------------------------- kernels -----------------------------------

def _gcn1_kernel(a_ref, x_ref, w1_ref, b1_ref, w2p_ref, g_ref, acc_ref):
    """G = relu((A @ X) @ W1 + b1) @ W2'   (tiled over rows i, reduced over cols k)."""
    k = pl.program_id(1)

    @pl.when(k == 0)
    def _():
        acc_ref[...] = jnp.zeros_like(acc_ref)

    # N^2 contraction at width Cin (narrow), bf16 operands, f32 accumulate.
    acc_ref[...] += jnp.dot(a_ref[...], x_ref[...],
                            preferred_element_type=jnp.float32)

    @pl.when(k == pl.num_programs(1) - 1)
    def _():
        h = jnp.dot(acc_ref[...], w1_ref[...],
                    preferred_element_type=jnp.float32) + b1_ref[...]
        h = jnp.maximum(h, 0.0)
        g = jnp.dot(h, w2p_ref[...], preferred_element_type=jnp.float32)
        g_ref[...] = g.astype(g_ref.dtype)


def _gcn2_kernel(a_ref, g_ref, bp_ref, o_ref, acc_ref):
    """OUT = A @ G + b'   (tiled over rows i, reduced over cols k)."""
    k = pl.program_id(1)

    @pl.when(k == 0)
    def _():
        acc_ref[...] = jnp.zeros_like(acc_ref)

    acc_ref[...] += jnp.dot(a_ref[...], g_ref[...],
                            preferred_element_type=jnp.float32)

    @pl.when(k == pl.num_programs(1) - 1)
    def _():
        o_ref[...] = acc_ref[...] + bp_ref[...]


# ------------------------------- wrapper ------------------------------------

def _round_up(x, m):
    return ((x + m - 1) // m) * m


def _pad2d(a, rows, cols):
    return jnp.pad(a, ((0, rows - a.shape[0]), (0, cols - a.shape[1])))


def build_norm_adj(edge_index, n):
    """Dense D^-1/2 (A + I) D^-1/2, rows = target nodes (PyG GCNConv semantics)."""
    src, dst = edge_index[0], edge_index[1]
    adj = jnp.zeros((n, n), jnp.float32).at[dst, src].set(1.0)
    adj = adj + jnp.eye(n, dtype=jnp.float32)
    deg = adj.sum(axis=1)
    dinv = jnp.where(deg > 0, 1.0 / jnp.sqrt(deg), 0.0)
    return dinv[:, None] * adj * dinv[None, :]


def encoder_forward(x, edge_index, params, *, tile_cap=512):
    """x: [N, Cin] float32, edge_index: [2, E] int32."""
    n, cin = x.shape
    w1, b1, w2, b2, wfc, bfc = params
    hid = w1.shape[1]
    out = wfc.shape[1]

    # ---- fold fc into conv2 (no nonlinearity between them) ----
    w2p = jnp.dot(w2, wfc)             # [hid, out]
    bp = jnp.dot(b2, wfc) + bfc        # [1, out]

    # ---- glue: dense GCN-normalized adjacency ----
    a_norm = build_norm_adj(edge_index, n)

    # ---- padding / tiling choices ----
    np_ = _round_up(n, 128)
    if np_ > tile_cap:
        tile = tile_cap
        np_ = _round_up(np_, tile)
    else:
        tile = np_
    cin_p = _round_up(cin, 128)
    hid_p = _round_up(hid, 128)
    out_p = _round_up(out, 128)

    # O(N^2) array (and streamed features) in bf16; weights/biases stay f32.
    a_p = _pad2d(a_norm, np_, np_).astype(jnp.bfloat16)
    x_p = _pad2d(x, np_, cin_p).astype(jnp.bfloat16)
    w1_p = _pad2d(w1, cin_p, hid_p)
    b1_p = _pad2d(b1, 1, hid_p)
    w2p_p = _pad2d(w2p, hid_p, out_p)
    bp_p = _pad2d(bp, 1, out_p)

    grid = (np_ // tile, np_ // tile)
    cparams = pltpu.CompilerParams(
        dimension_semantics=("parallel", "arbitrary"))

    # ---- kernel 1: G = relu((A @ X) @ W1 + b1) @ W2' ----
    g = pl.pallas_call(
        _gcn1_kernel,
        out_shape=jax.ShapeDtypeStruct((np_, out_p), jnp.bfloat16),
        grid_spec=pltpu.PrefetchScalarGridSpec(
            num_scalar_prefetch=0,
            grid=grid,
            in_specs=[
                pl.BlockSpec((tile, tile), lambda i, k: (i, k)),      # A
                pl.BlockSpec((tile, cin_p), lambda i, k: (k, 0)),     # X
                pl.BlockSpec((cin_p, hid_p), lambda i, k: (0, 0)),    # W1
                pl.BlockSpec((1, hid_p), lambda i, k: (0, 0)),        # b1
                pl.BlockSpec((hid_p, out_p), lambda i, k: (0, 0)),    # W2'
            ],
            out_specs=pl.BlockSpec((tile, out_p), lambda i, k: (i, 0)),
            scratch_shapes=[pltpu.VMEM((tile, cin_p), jnp.float32)],
        ),
        compiler_params=cparams,
    )(a_p, x_p, w1_p, b1_p, w2p_p)

    # ---- kernel 2: OUT = A @ G + b' ----
    out_full = pl.pallas_call(
        _gcn2_kernel,
        out_shape=jax.ShapeDtypeStruct((np_, out_p), jnp.float32),
        grid_spec=pltpu.PrefetchScalarGridSpec(
            num_scalar_prefetch=0,
            grid=grid,
            in_specs=[
                pl.BlockSpec((tile, tile), lambda i, k: (i, k)),      # A
                pl.BlockSpec((tile, out_p), lambda i, k: (k, 0)),     # G
                pl.BlockSpec((1, out_p), lambda i, k: (0, 0)),        # b'
            ],
            out_specs=pl.BlockSpec((tile, out_p), lambda i, k: (i, 0)),
            scratch_shapes=[pltpu.VMEM((tile, out_p), jnp.float32)],
        ),
        compiler_params=cparams,
    )(a_p, g, bp_p)

    return out_full[:n, :out]


# ------------------------------- params / demo ------------------------------

def init_params(key, in_channels, out_channels):
    hidden = 2 * out_channels
    ks = jax.random.split(key, 6)

    def glorot(k, shape):
        fan_in, fan_out = shape
        lim = jnp.sqrt(6.0 / (fan_in + fan_out))
        return jax.random.uniform(k, shape, jnp.float32, -lim, lim)

    w1 = glorot(ks[0], (in_channels, hidden))          # GCNConv1 weight
    b1 = jnp.zeros((1, hidden), jnp.float32)           # GCNConv1 bias
    w2 = glorot(ks[1], (hidden, out_channels))         # GCNConv2 weight
    b2 = jnp.zeros((1, out_channels), jnp.float32)     # GCNConv2 bias
    wfc = glorot(ks[2], (out_channels, out_channels))  # Linear weight (stored [in, out])
    bfc = jax.random.uniform(ks[3], (1, out_channels), jnp.float32,
                             -1.0 / jnp.sqrt(out_channels),
                             1.0 / jnp.sqrt(out_channels))
    return (w1, b1, w2, b2, wfc, bfc)


def _reference(x, edge_index, params):
    w1, b1, w2, b2, wfc, bfc = params
    a = build_norm_adj(edge_index, x.shape[0])
    h = jnp.maximum(a @ (x @ w1) + b1, 0.0)
    h = a @ (h @ w2) + b2
    return h @ wfc + bfc


if __name__ == "__main__":
    key = jax.random.PRNGKey(0)
    k_x, k_p = jax.random.split(key)

    N = 16            # number of graph nodes
    IN_CHANNELS = 8
    OUT_CHANNELS = 8  # hidden = 2 * OUT_CHANNELS = 16

    # deterministic node features
    x = jax.random.normal(k_x, (N, IN_CHANNELS), jnp.float32)

    # deterministic bidirectional ring graph: i <-> (i+1) % N
    idx = jnp.arange(N, dtype=jnp.int32)
    src = jnp.concatenate([idx, (idx + 1) % N])
    dst = jnp.concatenate([(idx + 1) % N, idx])
    edge_index = jnp.stack([src, dst], axis=0)         # [2, 2N]

    params = init_params(k_p, IN_CHANNELS, OUT_CHANNELS)

    out = encoder_forward(x, edge_index, params)
    jax.block_until_ready(out)
    assert out.shape == (N, OUT_CHANNELS)

    ref = _reference(x, edge_index, params)
    assert jnp.allclose(out, ref, rtol=5e-2, atol=5e-2), "mismatch vs reference"

    print("KERNEL_OK")
</pallas_src>

<mosaic_0001>
module attributes {stable_mosaic.version = 11 : i64} {
  func.func @_gcn1_kernel(%arg0: i32, %arg1: i32, %arg2: memref<128x128xbf16, #tpu.memory_space<vmem>>, %arg3: memref<128x128xbf16, #tpu.memory_space<vmem>>, %arg4: memref<128x128xf32, #tpu.memory_space<vmem>>, %arg5: memref<1x128xf32, #tpu.memory_space<vmem>>, %arg6: memref<128x128xf32, #tpu.memory_space<vmem>>, %arg7: memref<128x128xbf16, #tpu.memory_space<vmem>>, %arg8: memref<128x128xf32, #tpu.memory_space<vmem>>) attributes {dimension_semantics = [#tpu.dimension_semantics<parallel>, #tpu.dimension_semantics<arbitrary>], iteration_bounds = array<i64: 1, 1>, scalar_prefetch = 0 : i64, scratch_operands = 1 : i64, tpu.core_type = #tpu.core_type<tc>, window_params = [{transform_indices = @transform_0, window_bounds = array<i64: 128, 128>}, {transform_indices = @transform_1, window_bounds = array<i64: 128, 128>}, {pipeline_mode = #tpu.pipeline_mode<synchronous>, transform_indices = @transform_2, window_bounds = array<i64: 128, 128>}, {pipeline_mode = #tpu.pipeline_mode<synchronous>, transform_indices = @transform_3, window_bounds = array<i64: 1, 128>}, {pipeline_mode = #tpu.pipeline_mode<synchronous>, transform_indices = @transform_4, window_bounds = array<i64: 128, 128>}, {transform_indices = @transform_5, window_bounds = array<i64: 128, 128>}]} {
    %c0_i32 = arith.constant 0 : i32
    %0 = arith.cmpi eq, %arg1, %c0_i32 : i32
    %1 = arith.extui %0 : i1 to i32
    %c0_i32_0 = arith.constant 0 : i32
    %2 = arith.cmpi ne, %1, %c0_i32_0 : i32
    scf.if %2 {
      %cst_10 = arith.constant 0.000000e+00 : f32
      %12 = vector.broadcast %cst_10 : f32 to vector<128x128xf32>
      %c0_11 = arith.constant 0 : index
      %c0_12 = arith.constant 0 : index
      %13 = vector.load %arg8[%c0_11, %c0_12] : memref<128x128xf32, #tpu.memory_space<vmem>>, vector<128x128xf32>
      tpu.vector_store %arg8[%c0_11, %c0_12], %12 {strides = array<i32>} : memref<128x128xf32, #tpu.memory_space<vmem>>, vector<128x128xf32>,
    } else {
    }
    %c0 = arith.constant 0 : index
    %c0_1 = arith.constant 0 : index
    %3 = vector.load %arg8[%c0, %c0_1] : memref<128x128xf32, #tpu.memory_space<vmem>>, vector<128x128xf32>
    %c0_2 = arith.constant 0 : index
    %c0_3 = arith.constant 0 : index
    %4 = vector.load %arg2[%c0_2, %c0_3] : memref<128x128xbf16, #tpu.memory_space<vmem>>, vector<128x128xbf16>
    %c0_4 = arith.constant 0 : index
    %c0_5 = arith.constant 0 : index
    %5 = vector.load %arg3[%c0_4, %c0_5] : memref<128x128xbf16, #tpu.memory_space<vmem>>, vector<128x128xbf16>
    %cst = arith.constant dense<0.000000e+00> : vector<128x128xf32>
    %6 = tpu.matmul %4, %5, %cst {dimension_numbers = #tpu.dot_dimension_numbers<[1], [0], [0], [1], [0, 0, 1, 1], [], []>} : vector<128x128xbf16>, vector<128x128xbf16>, vector<128x128xf32> -> vector<128x128xf32>
    %7 = arith.addf %3, %6 : vector<128x128xf32>
    %c0_6 = arith.constant 0 : index
    %c0_7 = arith.constant 0 : index
    %8 = vector.load %arg8[%c0_6, %c0_7] : memref<128x128xf32, #tpu.memory_space<vmem>>, vector<128x128xf32>
    tpu.vector_store %arg8[%c0_6, %c0_7], %7 {strides = array<i32>} : memref<128x128xf32, #tpu.memory_space<vmem>>, vector<128x128xf32>,
    %c0_i32_8 = arith.constant 0 : i32
    %9 = arith.cmpi eq, %arg1, %c0_i32_8 : i32
    %10 = arith.extui %9 : i1 to i32
    %c0_i32_9 = arith.constant 0 : i32
    %11 = arith.cmpi ne, %10, %c0_i32_9 : i32
    scf.if %11 {
      %c0_10 = arith.constant 0 : index
      %c0_11 = arith.constant 0 : index
      %12 = vector.load %arg8[%c0_10, %c0_11] : memref<128x128xf32, #tpu.memory_space<vmem>>, vector<128x128xf32>
      %c0_12 = arith.constant 0 : index
      %c0_13 = arith.constant 0 : index
      %13 = vector.load %arg4[%c0_12, %c0_13] : memref<128x128xf32, #tpu.memory_space<vmem>>, vector<128x128xf32>
      %cst_14 = arith.constant dense<0.000000e+00> : vector<128x128xf32>
      %14 = tpu.matmul %12, %13, %cst_14 {dimension_numbers = #tpu.dot_dimension_numbers<[1], [0], [0], [1], [0, 0, 1, 1], [], []>} : vector<128x128xf32>, vector<128x128xf32>, vector<128x128xf32> -> vector<128x128xf32>
      %c0_15 = arith.constant 0 : index
      %c0_16 = arith.constant 0 : index
      %15 = vector.load %arg5[%c0_15, %c0_16] : memref<1x128xf32, #tpu.memory_space<vmem>>, vector<1x128xf32>
      %16 = vector.broadcast %15 : vector<1x128xf32> to vector<128x128xf32>
      %17 = arith.addf %14, %16 : vector<128x128xf32>
      %cst_17 = arith.constant 0.000000e+00 : f32
      %18 = vector.broadcast %cst_17 : f32 to vector<128x128xf32>
      %19 = arith.maximumf %17, %18 : vector<128x128xf32>
      %c0_18 = arith.constant 0 : index
      %c0_19 = arith.constant 0 : index
      %20 = vector.load %arg6[%c0_18, %c0_19] : memref<128x128xf32, #tpu.memory_space<vmem>>, vector<128x128xf32>
      %cst_20 = arith.constant dense<0.000000e+00> : vector<128x128xf32>
      %21 = tpu.matmul %19, %20, %cst_20 {dimension_numbers = #tpu.dot_dimension_numbers<[1], [0], [0], [1], [0, 0, 1, 1], [], []>} : vector<128x128xf32>, vector<128x128xf32>, vector<128x128xf32> -> vector<128x128xf32>
      %22 = arith.truncf %21 : vector<128x128xf32> to vector<128x128xbf16>
      %c0_21 = arith.constant 0 : index
      %c0_22 = arith.constant 0 : index
      %23 = vector.load %arg7[%c0_21, %c0_22] : memref<128x128xbf16, #tpu.memory_space<vmem>>, vector<128x128xbf16>
      tpu.vector_store %arg7[%c0_21, %c0_22], %22 {strides = array<i32>} : memref<128x128xbf16, #tpu.memory_space<vmem>>, vector<128x128xbf16>,
    } else {
    }
    return
  }
  func.func @transform_0(%arg0: i32, %arg1: i32) -> (i32, i32) {
    %c0_i32 = arith.constant 0 : i32
    return %arg0, %arg1 : i32, i32
  }
  func.func @transform_1(%arg0: i32, %arg1: i32) -> (i32, i32) {
    %c0_i32 = arith.constant 0 : i32
    %c0_i32_0 = arith.constant 0 : i32
    return %arg1, %c0_i32 : i32, i32
  }
  func.func @transform_2(%arg0: i32, %arg1: i32) -> (i32, i32) {
    %c0_i32 = arith.constant 0 : i32
    %c0_i32_0 = arith.constant 0 : i32
    %c0_i32_1 = arith.constant 0 : i32
    return %c0_i32, %c0_i32_0 : i32, i32
  }
  func.func @transform_3(%arg0: i32, %arg1: i32) -> (i32, i32) {
    %c0_i32 = arith.constant 0 : i32
    %c0_i32_0 = arith.constant 0 : i32
    %c0_i32_1 = arith.constant 0 : i32
    return %c0_i32, %c0_i32_0 : i32, i32
  }
  func.func @transform_4(%arg0: i32, %arg1: i32) -> (i32, i32) {
    %c0_i32 = arith.constant 0 : i32
    %c0_i32_0 = arith.constant 0 : i32
    %c0_i32_1 = arith.constant 0 : i32
    return %c0_i32, %c0_i32_0 : i32, i32
  }
  func.func @transform_5(%arg0: i32, %arg1: i32) -> (i32, i32) {
    %c0_i32 = arith.constant 0 : i32
    %c0_i32_0 = arith.constant 0 : i32
    return %arg0, %c0_i32 : i32, i32
  }
}

</mosaic_0001>

<llo_original>
// kernel: tpu_custom_call.1
$region0: #{tpu_custom_call.1}
  #allocation0 [shape = 'u32[]', space=smem, size = 0x4, offset = 0x4, fixed_abs, tag = 'smem constant byte address 0x4 - core index']
  #allocation1 [shape = 'u32[72,128]{1,0:T(1,128)}', space=vmem, size = 0x9000, scoped, tag = 'internal scratch']
  #allocation2 [shape = 'f32[128,128]{1,0:T(8,128)}', space=vmem, size = 0x10000, scoped, tag = 'scratch operand']
  %s0 = inlined_call_operand.hbm [shape: bf16[128,128], index: 0, kind: input, shape index: {}]
  %s1 = inlined_call_operand.hbm [shape: bf16[128,128], index: 1, kind: input, shape index: {}]
  %s2 = inlined_call_operand.hbm [shape: f32[128,128], index: 2, kind: input, shape index: {}]
  %s3 = inlined_call_operand.vmem [shape: f32[1,128], index: 3, kind: input, shape index: {}]
  %s4 = inlined_call_operand.hbm [shape: f32[128,128], index: 4, kind: input, shape index: {}]
  %s5 = inlined_call_operand.hbm [shape: bf16[128,128], index: 5, kind: output, shape index: {}]
  %s6 = sld [smem:[#allocation0]]
  $region54: #{tpu_custom_call.1} parent=0
    _
  %s8 = ssub.s32 1, %s6
  %s9 = scalar_select 0, %s8, %s6
  $region1: #{tpu_custom_call.1} parent=0
    #allocation3 [shape = 'u8[32768]{0}', space=vmem, size = 0x8000, scoped, tag = 'input window, operand 0, single buffered']
    #allocation4 [shape = 's32[1]{0}', space=sflag, size = 0x4, scoped, tag = 'scoped memory for tpu_custom_call.1']
    #allocation5 [shape = 's32[1]{0}', space=sflag, size = 0x4, scoped, tag = 'scoped memory for tpu_custom_call.1']
    #allocation6 [shape = 'u8[32768]{0}', space=vmem, size = 0x8000, scoped, tag = 'input window, operand 1, single buffered']
    #allocation7 [shape = 's32[1]{0}', space=sflag, size = 0x4, scoped, tag = 'scoped memory for tpu_custom_call.1']
    #allocation8 [shape = 'u8[65536]{0}', space=vmem, size = 0x10000, scoped, tag = 'input window, operand 2, single buffered']
    #allocation9 [shape = 'u8[65536]{0}', space=vmem, size = 0x10000, scoped, tag = 'input window, operand 4, single buffered']
    #allocation10 [shape = 's32[1]{0}', space=sflag, size = 0x4, scoped, tag = 'scoped memory for tpu_custom_call.1']
    #allocation11 [shape = 'u8[32768]{0}', space=vmem, size = 0x8000, scoped, tag = 'output window, operand 0, single buffered']
    %10 = vsyncpa [#allocation4], 0
    %11 = vsyncpa [#allocation7], 0
    %12 = vsyncpa [#allocation10], 0
    %13 = vsyncpa [#allocation5], 0
    // Predicated region
    $region2: #{tpu_custom_call.1} parent=1 // pred_check
      _
    $region3: #{tpu_custom_call.1} parent=1 // pred_check_branch
      %15 = sbr.rel (0) target = $region5
    $region4: #{tpu_custom_call.1} parent=1 // pred_region
      %17 = vsyncadd [#allocation4], 0
      %s18 = sshll.u32 %s0, 4
      %s19 = int_to_ptr.hbm [resolvable:$true] %s18
      %s20 = sshll.u32 [#allocation3], 4
      %s21 = int_to_ptr.vmem [resolvable:$true] %s20
      %26 = dma.hbm_to_vmem [thread:$0]  %s19, 1024, %s21, [#allocation4], 64, 64, 4
    $region5: #{tpu_custom_call.1} parent=1 // pred_fallthru
      _
    // Predicated region
    $region6: #{tpu_custom_call.1} parent=1 // pred_check
      _
    $region7: #{tpu_custom_call.1} parent=1 // pred_check_branch
      %28 = sbr.rel (0) target = $region9
    $region8: #{tpu_custom_call.1} parent=1 // pred_region
      %30 = vsyncadd [#allocation7], 0
      %s31 = sshll.u32 %s1, 4
      %s32 = int_to_ptr.hbm [resolvable:$true] %s31
      %s33 = sshll.u32 [#allocation6], 4
      %s34 = int_to_ptr.vmem [resolvable:$true] %s33
      %39 = dma.hbm_to_vmem [thread:$0]  %s32, 1024, %s34, [#allocation7], 64, 64, 4
    $region9: #{tpu_custom_call.1} parent=1 // pred_fallthru
      _
    // Predicated region
    $region10: #{tpu_custom_call.1} parent=1 // pred_check
      _
    $region11: #{tpu_custom_call.1} parent=1 // pred_check_branch
      %41 = sbr.rel (0) target = $region13
    $region12: #{tpu_custom_call.1} parent=1 // pred_region
      %43 = vsyncadd [#allocation7], 0
      %s44 = sshll.u32 %s2, 4
      %s45 = int_to_ptr.hbm [resolvable:$true] %s44
      %s46 = sshll.u32 [#allocation8], 4
      %s47 = int_to_ptr.vmem [resolvable:$true] %s46
      %52 = dma.hbm_to_vmem [thread:$0]  %s45, 2048, %s47, [#allocation7], 128, 128, 8
    $region13: #{tpu_custom_call.1} parent=1 // pred_fallthru
      _
    // Predicated region
    $region14: #{tpu_custom_call.1} parent=1 // pred_check
      _
    $region15: #{tpu_custom_call.1} parent=1 // pred_check_branch
      %54 = sbr.rel (0) target = $region17
    $region16: #{tpu_custom_call.1} parent=1 // pred_region
      _
    $region17: #{tpu_custom_call.1} parent=1 // pred_fallthru
      _
    // Predicated region
    $region18: #{tpu_custom_call.1} parent=1 // pred_check
      _
    $region19: #{tpu_custom_call.1} parent=1 // pred_check_branch
      %56 = sbr.rel (0) target = $region21
    $region20: #{tpu_custom_call.1} parent=1 // pred_region
      %58 = vsyncadd [#allocation10], 0
      %s59 = sshll.u32 %s4, 4
      %s60 = int_to_ptr.hbm [resolvable:$true] %s59
      %s61 = sshll.u32 [#allocation9], 4
      %s62 = int_to_ptr.vmem [resolvable:$true] %s61
      %67 = dma.hbm_to_vmem [thread:$0]  %s60, 2048, %s62, [#allocation10], 128, 128, 8
    $region21: #{tpu_custom_call.1} parent=1 // pred_fallthru
      _
    // Predicated region
    $region22: #{tpu_custom_call.1} parent=1 // pred_check
      _
    $region23: #{tpu_custom_call.1} parent=1 // pred_check_branch
      %69 = sbr.rel (0) target = $region25
    $region24: #{tpu_custom_call.1} parent=1 // pred_region
      %71 = dma.done [#allocation4], 1024
    $region25: #{tpu_custom_call.1} parent=1 // pred_fallthru
      _
    // Predicated region
    $region26: #{tpu_custom_call.1} parent=1 // pred_check
      _
    $region27: #{tpu_custom_call.1} parent=1 // pred_check_branch
      %73 = sbr.rel (0) target = $region29
    $region28: #{tpu_custom_call.1} parent=1 // pred_region
      %75 = dma.done [#allocation7], 1024
    $region29: #{tpu_custom_call.1} parent=1 // pred_fallthru
      _
    // Predicated region
    $region30: #{tpu_custom_call.1} parent=1 // pred_check
      _
    $region31: #{tpu_custom_call.1} parent=1 // pred_check_branch
      %77 = sbr.rel (0) target = $region33
    $region32: #{tpu_custom_call.1} parent=1 // pred_region
      %79 = dma.done [#allocation7], 2048
    $region33: #{tpu_custom_call.1} parent=1 // pred_fallthru
      _
    // Predicated region
    $region34: #{tpu_custom_call.1} parent=1 // pred_check
      _
    $region35: #{tpu_custom_call.1} parent=1 // pred_check_branch
      %81 = sbr.rel (0) target = $region37
    $region36: #{tpu_custom_call.1} parent=1 // pred_region
      %83 = dma.done [#allocation10], 2048
    $region37: #{tpu_custom_call.1} parent=1 // pred_fallthru
      _
    %p84 = scmp.eq.s32.totalorder 0, 0
    // Predicated region
    $region38: #{tpu_custom_call.1} parent=1 // pred_check
      %p85 = pneg %p84
    $region39: #{tpu_custom_call.1} parent=1 // pred_check_branch
      %87 = sbr.rel (%p85) target = $region41
    $region40: #{tpu_custom_call.1} parent=1 // pred_region
      %88 = vst [vmem:[#allocation2] sm:$0xff] 0.0
      %89 = vst [vmem:[#allocation2 + $0x8] sm:$0xff] 0.0
      %90 = vst [vmem:[#allocation2 + $0x10] sm:$0xff] 0.0
      %91 = vst [vmem:[#allocation2 + $0x18] sm:$0xff] 0.0
      %92 = vst [vmem:[#allocation2 + $0x20] sm:$0xff] 0.0
      %93 = vst [vmem:[#allocation2 + $0x28] sm:$0xff] 0.0
      %94 = vst [vmem:[#allocation2 + $0x30] sm:$0xff] 0.0
      %95 = vst [vmem:[#allocation2 + $0x38] sm:$0xff] 0.0
      %96 = vst [vmem:[#allocation2 + $0x40] sm:$0xff] 0.0
      %97 = vst [vmem:[#allocation2 + $0x48] sm:$0xff] 0.0
      %98 = vst [vmem:[#allocation2 + $0x50] sm:$0xff] 0.0
      %99 = vst [vmem:[#allocation2 + $0x58] sm:$0xff] 0.0
      %100 = vst [vmem:[#allocation2 + $0x60] sm:$0xff] 0.0
      %101 = vst [vmem:[#allocation2 + $0x68] sm:$0xff] 0.0
      %102 = vst [vmem:[#allocation2 + $0x70] sm:$0xff] 0.0
      %103 = vst [vmem:[#allocation2 + $0x78] sm:$0xff] 0.0
    $region41: #{tpu_custom_call.1} parent=1 // pred_fallthru
      _
    %v104 = vld [vmem:[#allocation2] sm:$0xff]
    %v105 = vld [vmem:[#allocation2 + $0x8] sm:$0xff]
    %v106 = vld [vmem:[#allocation2 + $0x10] sm:$0xff]
    %v107 = vld [vmem:[#allocation2 + $0x18] sm:$0xff]
    %v108 = vld [vmem:[#allocation2 + $0x20] sm:$0xff]
    %v109 = vld [vmem:[#allocation2 + $0x28] sm:$0xff]
    %v110 = vld [vmem:[#allocation2 + $0x30] sm:$0xff]
    %v111 = vld [vmem:[#allocation2 + $0x38] sm:$0xff]
    %v112 = vld [vmem:[#allocation2 + $0x40] sm:$0xff]
    %v113 = vld [vmem:[#allocation2 + $0x48] sm:$0xff]
    %v114 = vld [vmem:[#allocation2 + $0x50] sm:$0xff]
    %v115 = vld [vmem:[#allocation2 + $0x58] sm:$0xff]
    %v116 = vld [vmem:[#allocation2 + $0x60] sm:$0xff]
    %v117 = vld [vmem:[#allocation2 + $0x68] sm:$0xff]
    %v118 = vld [vmem:[#allocation2 + $0x70] sm:$0xff]
    %v119 = vld [vmem:[#allocation2 + $0x78] sm:$0xff]
    %v120 = vld [vmem:[#allocation3] sm:$0xf]
    %v121 = vld [vmem:[#allocation3 + $0x4] sm:$0xf]
    %v122 = vld [vmem:[#allocation3 + $0x8] sm:$0xf]
    %v123 = vld [vmem:[#allocation3 + $0xc] sm:$0xf]
    %v124 = vld [vmem:[#allocation3 + $0x10] sm:$0xf]
    %v125 = vld [vmem:[#allocation3 + $0x14] sm:$0xf]
    %v126 = vld [vmem:[#allocation3 + $0x18] sm:$0xf]
    %v127 = vld [vmem:[#allocation3 + $0x1c] sm:$0xf]
    %v128 = vld [vmem:[#allocation3 + $0x20] sm:$0xf]
    %v129 = vld [vmem:[#allocation3 + $0x24] sm:$0xf]
    %v130 = vld [vmem:[#allocation3 + $0x28] sm:$0xf]
    %v131 = vld [vmem:[#allocation3 + $0x2c] sm:$0xf]
    %v132 = vld [vmem:[#allocation3 + $0x30] sm:$0xf]
    %v133 = vld [vmem:[#allocation3 + $0x34] sm:$0xf]
    %v134 = vld [vmem:[#allocation3 + $0x38] sm:$0xf]
    %v135 = vld [vmem:[#allocation3 + $0x3c] sm:$0xf]
    %v136 = vld [vmem:[#allocation6] sm:$0xf]
    %v137 = vld [vmem:[#allocation6 + $0x4] sm:$0xf]
    %v138 = vld [vmem:[#allocation6 + $0x8] sm:$0xf]
    %v139 = vld [vmem:[#allocation6 + $0xc] sm:$0xf]
    %v140 = vld [vmem:[#allocation6 + $0x10] sm:$0xf]
    %v141 = vld [vmem:[#allocation6 + $0x14] sm:$0xf]
    %v142 = vld [vmem:[#allocation6 + $0x18] sm:$0xf]
    %v143 = vld [vmem:[#allocation6 + $0x1c] sm:$0xf]
    %v144 = vld [vmem:[#allocation6 + $0x20] sm:$0xf]
    %v145 = vld [vmem:[#allocation6 + $0x24] sm:$0xf]
    %v146 = vld [vmem:[#allocation6 + $0x28] sm:$0xf]
    %v147 = vld [vmem:[#allocation6 + $0x2c] sm:$0xf]
    %v148 = vld [vmem:[#allocation6 + $0x30] sm:$0xf]
    %v149 = vld [vmem:[#allocation6 + $0x34] sm:$0xf]
    %v150 = vld [vmem:[#allocation6 + $0x38] sm:$0xf]
    %v151 = vld [vmem:[#allocation6 + $0x3c] sm:$0xf]
    %v168 = vunpack.c.l.b16 %v120
    %v169 = vunpack.c.l.b16 %v121
    %v170 = vunpack.c.l.b16 %v122
    %v171 = vunpack.c.l.b16 %v123
    %v172 = vunpack.c.l.b16 %v124
    %v173 = vunpack.c.l.b16 %v125
    %v174 = vunpack.c.l.b16 %v126
    %v175 = vunpack.c.l.b16 %v127
    %v176 = vunpack.c.l.b16 %v128
    %v177 = vunpack.c.l.b16 %v129
    %v178 = vunpack.c.l.b16 %v130
    %v179 = vunpack.c.l.b16 %v131
    %v180 = vunpack.c.l.b16 %v132
    %v181 = vunpack.c.l.b16 %v133
    %v182 = vunpack.c.l.b16 %v134
    %v183 = vunpack.c.l.b16 %v135
    %v184 = vpack.c.b16 %v169, %v168
    %v185 = vpack.c.b16 %v171, %v170
    %v186 = vpack.c.b16 %v173, %v172
    %v187 = vpack.c.b16 %v175, %v174
    %v188 = vpack.c.b16 %v177, %v176
    %v189 = vpack.c.b16 %v179, %v178
    %v190 = vpack.c.b16 %v181, %v180
    %v191 = vpack.c.b16 %v183, %v182
    %v216 = vunpack.c.l.b16 %v136
    %v217 = vunpack.c.l.b16 %v137
    %v218 = vunpack.c.l.b16 %v138
    %v219 = vunpack.c.l.b16 %v139
    %v220 = vunpack.c.l.b16 %v140
    %v221 = vunpack.c.l.b16 %v141
    %v222 = vunpack.c.l.b16 %v142
    %v223 = vunpack.c.l.b16 %v143
    %v224 = vunpack.c.l.b16 %v144
    %v225 = vunpack.c.l.b16 %v145
    %v226 = vunpack.c.l.b16 %v146
    %v227 = vunpack.c.l.b16 %v147
    %v228 = vunpack.c.l.b16 %v148
    %v229 = vunpack.c.l.b16 %v149
    %v230 = vunpack.c.l.b16 %v150
    %v231 = vunpack.c.l.b16 %v151
    %v232 = vpack.c.b16 %v217, %v216
    %v233 = vpack.c.b16 %v219, %v218
    %v234 = vpack.c.b16 %v221, %v220
    %v235 = vpack.c.b16 %v223, %v222
    %v236 = vpack.c.b16 %v225, %v224
    %v237 = vpack.c.b16 %v227, %v226
    %v238 = vpack.c.b16 %v229, %v228
    %v239 = vpack.c.b16 %v231, %v230
    %248 = vmatpush.bf16.msra.mxu0 %v239
    %249 = vmatpush.bf16.msra.mxu0 %v238
    %250 = vmatpush.bf16.msra.mxu0 %v237
    %251 = vmatpush.bf16.msra.mxu0 %v236
    %252 = vmatpush.bf16.msra.mxu0 %v235
    %253 = vmatpush.bf16.msra.mxu0 %v234
    %254 = vmatpush.bf16.msra.mxu0 %v233
    %255 = vmatpush.bf16.msra.mxu0 %v232
    %256 = vmatmul.bf16.gmra.mxu0 %v184
    %v257 = vpop.f32.mrf.mxu0
    %v258 = vadd.f32 0.0, %v257
    %v259 = vpop.f32.mrf.mxu0
    %v260 = vadd.f32 0.0, %v259
    %261 = vmatmul.bf16.gmra.mxu0 %v185
    %v262 = vpop.f32.mrf.mxu0
    %v263 = vadd.f32 0.0, %v262
    %v264 = vpop.f32.mrf.mxu0
    %v265 = vadd.f32 0.0, %v264
    %266 = vmatmul.bf16.gmra.mxu0 %v186
    %v267 = vpop.f32.mrf.mxu0
    %v268 = vadd.f32 0.0, %v267
    %v269 = vpop.f32.mrf.mxu0
    %v270 = vadd.f32 0.0, %v269
    %271 = vmatmul.bf16.gmra.mxu0 %v187
    %v272 = vpop.f32.mrf.mxu0
    %v273 = vadd.f32 0.0, %v272
    %v274 = vpop.f32.mrf.mxu0
    %v275 = vadd.f32 0.0, %v274
    %276 = vmatmul.bf16.gmra.mxu0 %v188
    %v277 = vpop.f32.mrf.mxu0
    %v278 = vadd.f32 0.0, %v277
    %v279 = vpop.f32.mrf.mxu0
    %v280 = vadd.f32 0.0, %v279
    %281 = vmatmul.bf16.gmra.mxu0 %v189
    %v282 = vpop.f32.mrf.mxu0
    %v283 = vadd.f32 0.0, %v282
    %v284 = vpop.f32.mrf.mxu0
    %v285 = vadd.f32 0.0, %v284
    %286 = vmatmul.bf16.gmra.mxu0 %v190
    %v287 = vpop.f32.mrf.mxu0
    %v288 = vadd.f32 0.0, %v287
    %v289 = vpop.f32.mrf.mxu0
    %v290 = vadd.f32 0.0, %v289
    %291 = vmatmul.bf16.gmra.mxu0 %v191
    %v292 = vpop.f32.mrf.mxu0
    %v293 = vadd.f32 0.0, %v292
    %v294 = vpop.f32.mrf.mxu0
    %v295 = vadd.f32 0.0, %v294
    %296 = vdwg.mxu0
    %v297 = vadd.f32 %v104, %v258
    %v298 = vadd.f32 %v105, %v260
    %v299 = vadd.f32 %v106, %v263
    %v300 = vadd.f32 %v107, %v265
    %v301 = vadd.f32 %v108, %v268
    %v302 = vadd.f32 %v109, %v270
    %v303 = vadd.f32 %v110, %v273
    %v304 = vadd.f32 %v111, %v275
    %v305 = vadd.f32 %v112, %v278
    %v306 = vadd.f32 %v113, %v280
    %v307 = vadd.f32 %v114, %v283
    %v308 = vadd.f32 %v115, %v285
    %v309 = vadd.f32 %v116, %v288
    %v310 = vadd.f32 %v117, %v290
    %v311 = vadd.f32 %v118, %v293
    %v312 = vadd.f32 %v119, %v295
    %313 = vst [vmem:[#allocation2] sm:$0xff] %v297
    %314 = vst [vmem:[#allocation2 + $0x8] sm:$0xff] %v298
    %315 = vst [vmem:[#allocation2 + $0x10] sm:$0xff] %v299
    %316 = vst [vmem:[#allocation2 + $0x18] sm:$0xff] %v300
    %317 = vst [vmem:[#allocation2 + $0x20] sm:$0xff] %v301
    %318 = vst [vmem:[#allocation2 + $0x28] sm:$0xff] %v302
    %319 = vst [vmem:[#allocation2 + $0x30] sm:$0xff] %v303
    %320 = vst [vmem:[#allocation2 + $0x38] sm:$0xff] %v304
    %321 = vst [vmem:[#allocation2 + $0x40] sm:$0xff] %v305
    %322 = vst [vmem:[#allocation2 + $0x48] sm:$0xff] %v306
    %323 = vst [vmem:[#allocation2 + $0x50] sm:$0xff] %v307
    %324 = vst [vmem:[#allocation2 + $0x58] sm:$0xff] %v308
    %325 = vst [vmem:[#allocation2 + $0x60] sm:$0xff] %v309
    %326 = vst [vmem:[#allocation2 + $0x68] sm:$0xff] %v310
    %327 = vst [vmem:[#allocation2 + $0x70] sm:$0xff] %v311
    %328 = vst [vmem:[#allocation2 + $0x78] sm:$0xff] %v312
    // Predicated region
    $region42: #{tpu_custom_call.1} parent=1 // pred_check
      %p329 = pneg %p84
    $region43: #{tpu_custom_call.1} parent=1 // pred_check_branch
      %331 = sbr.rel (%p329) target = $region45
    $region44: #{tpu_custom_call.1} parent=1 // pred_region
      %v332 = vld [vmem:[#allocation2] sm:$0xff]
      %v333 = vld [vmem:[#allocation2 + $0x8] sm:$0xff]
      %v334 = vld [vmem:[#allocation2 + $0x10] sm:$0xff]
      %v335 = vld [vmem:[#allocation2 + $0x18] sm:$0xff]
      %v336 = vld [vmem:[#allocation2 + $0x20] sm:$0xff]
      %v337 = vld [vmem:[#allocation2 + $0x28] sm:$0xff]
      %v338 = vld [vmem:[#allocation2 + $0x30] sm:$0xff]
      %v339 = vld [vmem:[#allocation2 + $0x38] sm:$0xff]
      %v340 = vld [vmem:[#allocation2 + $0x40] sm:$0xff]
      %v341 = vld [vmem:[#allocation2 + $0x48] sm:$0xff]
      %v342 = vld [vmem:[#allocation2 + $0x50] sm:$0xff]
      %v343 = vld [vmem:[#allocation2 + $0x58] sm:$0xff]
      %v344 = vld [vmem:[#allocation2 + $0x60] sm:$0xff]
      %v345 = vld [vmem:[#allocation2 + $0x68] sm:$0xff]
      %v346 = vld [vmem:[#allocation2 + $0x70] sm:$0xff]
      %v347 = vld [vmem:[#allocation2 + $0x78] sm:$0xff]
      %v348 = vld [vmem:[#allocation8] sm:$0xff]
      %v349 = vld [vmem:[#allocation8 + $0x8] sm:$0xff]
      %v350 = vld [vmem:[#allocation8 + $0x10] sm:$0xff]
      %v351 = vld [vmem:[#allocation8 + $0x18] sm:$0xff]
      %v352 = vld [vmem:[#allocation8 + $0x20] sm:$0xff]
      %v353 = vld [vmem:[#allocation8 + $0x28] sm:$0xff]
      %v354 = vld [vmem:[#allocation8 + $0x30] sm:$0xff]
      %v355 = vld [vmem:[#allocation8 + $0x38] sm:$0xff]
      %v356 = vld [vmem:[#allocation8 + $0x40] sm:$0xff]
      %v357 = vld [vmem:[#allocation8 + $0x48] sm:$0xff]
      %v358 = vld [vmem:[#allocation8 + $0x50] sm:$0xff]
      %v359 = vld [vmem:[#allocation8 + $0x58] sm:$0xff]
      %v360 = vld [vmem:[#allocation8 + $0x60] sm:$0xff]
      %v361 = vld [vmem:[#allocation8 + $0x68] sm:$0xff]
      %v362 = vld [vmem:[#allocation8 + $0x70] sm:$0xff]
      %v363 = vld [vmem:[#allocation8 + $0x78] sm:$0xff]
      %v364 = vld [vmem:[%s3] sm:$0x1]
      %v366 = vperm.slane %v364, 0
      %368 = vmatpush.msra.mxu0 %v363
      %369 = vmatpush.msra.mxu0 %v362
      %370 = vmatpush.msra.mxu0 %v361
      %371 = vmatpush.msra.mxu0 %v360
      %372 = vmatpush.msra.mxu0 %v359
      %373 = vmatpush.msra.mxu0 %v358
      %374 = vmatpush.msra.mxu0 %v357
      %375 = vmatpush.msra.mxu0 %v356
      %376 = vmatpush.msra.mxu0 %v355
      %377 = vmatpush.msra.mxu0 %v354
      %378 = vmatpush.msra.mxu0 %v353
      %379 = vmatpush.msra.mxu0 %v352
      %380 = vmatpush.msra.mxu0 %v351
      %381 = vmatpush.msra.mxu0 %v350
      %382 = vmatpush.msra.mxu0 %v349
      %383 = vmatpush.msra.mxu0 %v348
      %384 = vmatmul.f32.gmra.mxu0 %v332
      %v385 = vpop.f32.mrf.mxu0
      %v386 = vadd.f32 %v366, %v385
      %387 = vmatmul.f32.gmra.mxu0 %v333
      %v388 = vpop.f32.mrf.mxu0
      %v389 = vadd.f32 %v366, %v388
      %390 = vmatmul.f32.gmra.mxu0 %v334
      %v391 = vpop.f32.mrf.mxu0
      %v392 = vadd.f32 %v366, %v391
      %393 = vmatmul.f32.gmra.mxu0 %v335
      %v394 = vpop.f32.mrf.mxu0
      %v395 = vadd.f32 %v366, %v394
      %396 = vmatmul.f32.gmra.mxu0 %v336
      %v397 = vpop.f32.mrf.mxu0
      %v398 = vadd.f32 %v366, %v397
      %399 = vmatmul.f32.gmra.mxu0 %v337
      %v400 = vpop.f32.mrf.mxu0
      %v401 = vadd.f32 %v366, %v400
      %402 = vmatmul.f32.gmra.mxu0 %v338
      %v403 = vpop.f32.mrf.mxu0
      %v404 = vadd.f32 %v366, %v403
      %405 = vmatmul.f32.gmra.mxu0 %v339
      %v406 = vpop.f32.mrf.mxu0
      %v407 = vadd.f32 %v366, %v406
      %408 = vmatmul.f32.gmra.mxu0 %v340
      %v409 = vpop.f32.mrf.mxu0
      %v410 = vadd.f32 %v366, %v409
      %411 = vmatmul.f32.gmra.mxu0 %v341
      %v412 = vpop.f32.mrf.mxu0
      %v413 = vadd.f32 %v366, %v412
      %414 = vmatmul.f32.gmra.mxu0 %v342
      %v415 = vpop.f32.mrf.mxu0
      %v416 = vadd.f32 %v366, %v415
      %417 = vmatmul.f32.gmra.mxu0 %v343
      %v418 = vpop.f32.mrf.mxu0
      %v419 = vadd.f32 %v366, %v418
      %420 = vmatmul.f32.gmra.mxu0 %v344
      %v421 = vpop.f32.mrf.mxu0
      %v422 = vadd.f32 %v366, %v421
      %423 = vmatmul.f32.gmra.mxu0 %v345
      %v424 = vpop.f32.mrf.mxu0
      %v425 = vadd.f32 %v366, %v424
      %426 = vmatmul.f32.gmra.mxu0 %v346
      %v427 = vpop.f32.mrf.mxu0
      %v428 = vadd.f32 %v366, %v427
      %429 = vmatmul.f32.gmra.mxu0 %v347
      %v430 = vpop.f32.mrf.mxu0
      %v431 = vadd.f32 %v366, %v430
      %432 = vdwg.mxu0
      %v433 = vmax.f32 %v386, 0.0
      %v434 = vmax.f32 %v389, 0.0
      %v435 = vmax.f32 %v392, 0.0
      %v436 = vmax.f32 %v395, 0.0
      %v437 = vmax.f32 %v398, 0.0
      %v438 = vmax.f32 %v401, 0.0
      %v439 = vmax.f32 %v404, 0.0
      %v440 = vmax.f32 %v407, 0.0
      %v441 = vmax.f32 %v410, 0.0
      %v442 = vmax.f32 %v413, 0.0
      %v443 = vmax.f32 %v416, 0.0
      %v444 = vmax.f32 %v419, 0.0
      %v445 = vmax.f32 %v422, 0.0
      %v446 = vmax.f32 %v425, 0.0
      %v447 = vmax.f32 %v428, 0.0
      %v448 = vmax.f32 %v431, 0.0
      %v449 = vld [vmem:[#allocation9] sm:$0xff]
      %v450 = vld [vmem:[#allocation9 + $0x8] sm:$0xff]
      %v451 = vld [vmem:[#allocation9 + $0x10] sm:$0xff]
      %v452 = vld [vmem:[#allocation9 + $0x18] sm:$0xff]
      %v453 = vld [vmem:[#allocation9 + $0x20] sm:$0xff]
      %v454 = vld [vmem:[#allocation9 + $0x28] sm:$0xff]
      %v455 = vld [vmem:[#allocation9 + $0x30] sm:$0xff]
      %v456 = vld [vmem:[#allocation9 + $0x38] sm:$0xff]
      %v457 = vld [vmem:[#allocation9 + $0x40] sm:$0xff]
      %v458 = vld [vmem:[#allocation9 + $0x48] sm:$0xff]
      %v459 = vld [vmem:[#allocation9 + $0x50] sm:$0xff]
      %v460 = vld [vmem:[#allocation9 + $0x58] sm:$0xff]
      %v461 = vld [vmem:[#allocation9 + $0x60] sm:$0xff]
      %v462 = vld [vmem:[#allocation9 + $0x68] sm:$0xff]
      %v463 = vld [vmem:[#allocation9 + $0x70] sm:$0xff]
      %v464 = vld [vmem:[#allocation9 + $0x78] sm:$0xff]
      %465 = vmatpush.msra.mxu0 %v464
      %466 = vmatpush.msra.mxu0 %v463
      %467 = vmatpush.msra.mxu0 %v462
      %468 = vmatpush.msra.mxu0 %v461
      %469 = vmatpush.msra.mxu0 %v460
      %470 = vmatpush.msra.mxu0 %v459
      %471 = vmatpush.msra.mxu0 %v458
      %472 = vmatpush.msra.mxu0 %v457
      %473 = vmatpush.msra.mxu0 %v456
      %474 = vmatpush.msra.mxu0 %v455
      %475 = vmatpush.msra.mxu0 %v454
      %476 = vmatpush.msra.mxu0 %v453
      %477 = vmatpush.msra.mxu0 %v452
      %478 = vmatpush.msra.mxu0 %v451
      %479 = vmatpush.msra.mxu0 %v450
      %480 = vmatpush.msra.mxu0 %v449
      %481 = vmatmul.f32.gmra.mxu0 %v433
      %v482 = vpop.f32.mrf.mxu0
      %v483 = vadd.f32 0.0, %v482
      %484 = vmatmul.f32.gmra.mxu0 %v434
      %v485 = vpop.f32.mrf.mxu0
      %v486 = vadd.f32 0.0, %v485
      %487 = vmatmul.f32.gmra.mxu0 %v435
      %v488 = vpop.f32.mrf.mxu0
      %v489 = vadd.f32 0.0, %v488
      %490 = vmatmul.f32.gmra.mxu0 %v436
      %v491 = vpop.f32.mrf.mxu0
      %v492 = vadd.f32 0.0, %v491
      %493 = vmatmul.f32.gmra.mxu0 %v437
      %v494 = vpop.f32.mrf.mxu0
      %v495 = vadd.f32 0.0, %v494
      %496 = vmatmul.f32.gmra.mxu0 %v438
      %v497 = vpop.f32.mrf.mxu0
      %v498 = vadd.f32 0.0, %v497
      %499 = vmatmul.f32.gmra.mxu0 %v439
      %v500 = vpop.f32.mrf.mxu0
      %v501 = vadd.f32 0.0, %v500
      %502 = vmatmul.f32.gmra.mxu0 %v440
      %v503 = vpop.f32.mrf.mxu0
      %v504 = vadd.f32 0.0, %v503
      %505 = vmatmul.f32.gmra.mxu0 %v441
      %v506 = vpop.f32.mrf.mxu0
      %v507 = vadd.f32 0.0, %v506
      %508 = vmatmul.f32.gmra.mxu0 %v442
      %v509 = vpop.f32.mrf.mxu0
      %v510 = vadd.f32 0.0, %v509
      %511 = vmatmul.f32.gmra.mxu0 %v443
      %v512 = vpop.f32.mrf.mxu0
      %v513 = vadd.f32 0.0, %v512
      %514 = vmatmul.f32.gmra.mxu0 %v444
      %v515 = vpop.f32.mrf.mxu0
      %v516 = vadd.f32 0.0, %v515
      %517 = vmatmul.f32.gmra.mxu0 %v445
      %v518 = vpop.f32.mrf.mxu0
      %v519 = vadd.f32 0.0, %v518
      %520 = vmatmul.f32.gmra.mxu0 %v446
      %v521 = vpop.f32.mrf.mxu0
      %v522 = vadd.f32 0.0, %v521
      %523 = vmatmul.f32.gmra.mxu0 %v447
      %v524 = vpop.f32.mrf.mxu0
      %v525 = vadd.f32 0.0, %v524
      %526 = vmatmul.f32.gmra.mxu0 %v448
      %v527 = vpop.f32.mrf.mxu0
      %v528 = vadd.f32 0.0, %v527
      %529 = vdwg.mxu0
      %v530 = vpack.c.bf16 %v483, %v483
      %v531 = vpack.c.bf16 %v486, %v486
      %v532 = vpack.c.bf16 %v489, %v489
      %v533 = vpack.c.bf16 %v492, %v492
      %v534 = vpack.c.bf16 %v495, %v495
      %v535 = vpack.c.bf16 %v498, %v498
      %v536 = vpack.c.bf16 %v501, %v501
      %v537 = vpack.c.bf16 %v504, %v504
      %v538 = vpack.c.bf16 %v507, %v507
      %v539 = vpack.c.bf16 %v510, %v510
      %v540 = vpack.c.bf16 %v513, %v513
      %v541 = vpack.c.bf16 %v516, %v516
      %v542 = vpack.c.bf16 %v519, %v519
      %v543 = vpack.c.bf16 %v522, %v522
      %v544 = vpack.c.bf16 %v525, %v525
      %v545 = vpack.c.bf16 %v528, %v528
      %546 = vst [vmem:[#allocation11] sm:$0xf] %v530
      %547 = vst [vmem:[#allocation11 + $0x4] sm:$0xf] %v531
      %548 = vst [vmem:[#allocation11 + $0x8] sm:$0xf] %v532
      %549 = vst [vmem:[#allocation11 + $0xc] sm:$0xf] %v533
      %550 = vst [vmem:[#allocation11 + $0x10] sm:$0xf] %v534
      %551 = vst [vmem:[#allocation11 + $0x14] sm:$0xf] %v535
      %552 = vst [vmem:[#allocation11 + $0x18] sm:$0xf] %v536
      %553 = vst [vmem:[#allocation11 + $0x1c] sm:$0xf] %v537
      %554 = vst [vmem:[#allocation11 + $0x20] sm:$0xf] %v538
      %555 = vst [vmem:[#allocation11 + $0x24] sm:$0xf] %v539
      %556 = vst [vmem:[#allocation11 + $0x28] sm:$0xf] %v540
      %557 = vst [vmem:[#allocation11 + $0x2c] sm:$0xf] %v541
      %558 = vst [vmem:[#allocation11 + $0x30] sm:$0xf] %v542
      %559 = vst [vmem:[#allocation11 + $0x34] sm:$0xf] %v543
      %560 = vst [vmem:[#allocation11 + $0x38] sm:$0xf] %v544
      %561 = vst [vmem:[#allocation11 + $0x3c] sm:$0xf] %v545
    $region45: #{tpu_custom_call.1} parent=1 // pred_fallthru
      _
    // Predicated region
    $region46: #{tpu_custom_call.1} parent=1 // pred_check
      _
    $region47: #{tpu_custom_call.1} parent=1 // pred_check_branch
      %563 = sbr.rel (0) target = $region49
    $region48: #{tpu_custom_call.1} parent=1 // pred_region
      %565 = vsyncadd [#allocation5], 0
      %s566 = sshll.u32 [#allocation11], 4
      %s567 = int_to_ptr.vmem [resolvable:$true] %s566
      %s568 = sshll.u32 %s5, 4
      %s569 = int_to_ptr.hbm [resolvable:$true] %s568
      %574 = dma.vmem_to_hbm [thread:$0]  %s567, 1024, %s569, [#allocation5], 64, 64, 4
    $region49: #{tpu_custom_call.1} parent=1 // pred_fallthru
      _
    // Predicated region
    $region50: #{tpu_custom_call.1} parent=1 // pred_check
      _
    $region51: #{tpu_custom_call.1} parent=1 // pred_check_branch
      %576 = sbr.rel (0) target = $region53
    $region52: #{tpu_custom_call.1} parent=1 // pred_region
      %578 = dma.done [#allocation5], 1024
    $region53: #{tpu_custom_call.1} parent=1 // pred_fallthru
      _
    %579 = vsyncpa [#allocation4], 1
    %580 = vsyncpa [#allocation7], 1
    %581 = vsyncpa [#allocation10], 1
    %582 = vsyncpa [#allocation5], 1

</llo_original>
